<compile_context>
chip_gen: v6e
topology: v6e:2x2x1
jax: 0.10.0
libtpu: 0.0.40
codegen_flags: <defaults>
</compile_context>

<pallas_src>
import functools

import jax
import jax.numpy as jnp
from jax import lax
from jax.experimental import pallas as pl
from jax.experimental.pallas import tpu as pltpu


LANE = 128                              # pad K and N to multiples of this
MAX_TILE_M = 512                        # M tile cap (fits v7x 64 MiB VMEM)
VMEM_LIMIT_BYTES = 48 * 1024 * 1024     # explicit scoped-VMEM budget


def _round_up(x, m):
    return (x + m - 1) // m * m


# ----------------------------- Pallas kernel ------------------------------- #

def _matmul_bias_kernel(a_ref, w_ref, b_ref, o_ref, *, relu, normalize,
                        eps=1e-12):
    """o = act(A @ W + b) for one M-tile; optionally row-L2-normalized.

    a_ref: (TILE_M, K) bf16 im2col patches
    w_ref: (K, N)      bf16 flattened conv weights (full block, replicated)
    b_ref: (1, N)      f32 bias
    o_ref: (TILE_M, N) bf16 (hidden layers) or f32 (final layer)
    """
    acc = jnp.dot(a_ref[...], w_ref[...], preferred_element_type=jnp.float32)
    acc = acc + b_ref[...]                       # f32 epilogue
    if relu:
        acc = jnp.maximum(acc, 0.0)
    if normalize:
        # F.normalize: z / max(||z||, eps) == z * rsqrt(max(||z||^2, eps^2))
        sumsq = jnp.sum(acc * acc, axis=-1, keepdims=True)
        acc = acc * lax.rsqrt(jnp.maximum(sumsq, eps * eps))
    o_ref[...] = acc.astype(o_ref.dtype)


def conv_as_matmul(patches, w_mat, bias, *, relu, normalize, out_dtype):
    """One conv layer as a tiled, software-pipelined Pallas matmul.

    patches: (M, K) bf16, K already padded to a multiple of 128.
    w_mat  : (K, N) bf16, N padded to a multiple of 128.
    bias   : (N,)   f32.
    """
    M, K = patches.shape
    Kw, N = w_mat.shape
    assert K == Kw and K % LANE == 0 and N % LANE == 0

    tile_m = min(MAX_TILE_M, _round_up(M, 8))
    m_pad = _round_up(M, tile_m)
    if m_pad != M:
        patches = jnp.pad(patches, ((0, m_pad - M), (0, 0)))

    kernel = functools.partial(_matmul_bias_kernel, relu=relu,
                               normalize=normalize)
    out = pl.pallas_call(
        kernel,
        out_shape=jax.ShapeDtypeStruct((m_pad, N), out_dtype),
        grid=(m_pad // tile_m,),
        in_specs=[
            pl.BlockSpec((tile_m, K), lambda i: (i, 0)),   # patches: tiled M
            pl.BlockSpec((K, N), lambda i: (0, 0)),        # weights: replicated
            pl.BlockSpec((1, N), lambda i: (0, 0)),        # bias: replicated
        ],
        out_specs=pl.BlockSpec((tile_m, N), lambda i: (i, 0)),
        compiler_params=pltpu.CompilerParams(
            dimension_semantics=("parallel",),   # shard M tiles across TCs
            vmem_limit_bytes=VMEM_LIMIT_BYTES,
        ),
    )(patches, w_mat, bias.reshape(1, N))
    return out[:M]


# ------------------------------ JAX glue ----------------------------------- #

def im2col(x_nhwc, kh, kw, stride, pad, k_padded):
    """Extract conv patches -> ((B*Ho*Wo, k_padded) bf16, Ho, Wo)."""
    x = jnp.pad(x_nhwc, ((0, 0), (pad, pad), (pad, pad), (0, 0)))
    B, Hp, Wp, C = x.shape
    Ho = (Hp - kh) // stride + 1
    Wo = (Wp - kw) // stride + 1
    cols = []
    for i in range(kh):
        for j in range(kw):
            cols.append(x[:, i:i + stride * Ho:stride,
                          j:j + stride * Wo:stride, :])
    patches = jnp.stack(cols, axis=3)                    # (B, Ho, Wo, kh*kw, C)
    patches = patches.reshape(B * Ho * Wo, kh * kw * C)
    K = kh * kw * C
    if k_padded != K:
        patches = jnp.pad(patches, ((0, 0), (0, k_padded - K)))
    return patches.astype(jnp.bfloat16), Ho, Wo


def init_conv_params(key, c_in, c_out, k):
    """nn.Conv2d default init (uniform +-1/sqrt(fan_in)).  Weight flattened to
    (kh*kw*c_in, c_out) in the same (kh, kw, c_in) ordering as im2col, then
    K and N zero-padded to multiples of 128 (lane-dense MXU / stores)."""
    wk, bk = jax.random.split(key)
    fan_in = c_in * k * k
    bound = 1.0 / (fan_in ** 0.5)
    w = jax.random.uniform(wk, (c_out, c_in, k, k), jnp.float32, -bound, bound)
    b = jax.random.uniform(bk, (c_out,), jnp.float32, -bound, bound)
    w_mat = jnp.transpose(w, (2, 3, 1, 0)).reshape(k * k * c_in, c_out)
    kp = _round_up(k * k * c_in, LANE)
    np_ = _round_up(c_out, LANE)
    w_mat = jnp.pad(w_mat, ((0, kp - k * k * c_in), (0, np_ - c_out)))
    b_pad = jnp.pad(b, (0, np_ - c_out))
    return dict(w=w_mat.astype(jnp.bfloat16), b=b_pad.astype(jnp.float32),
                c_out=c_out, k=k, k_padded=kp)


def make_encoder_params(key, in_channels, hidden_channels, embed_dim):
    k1, k2, k3 = jax.random.split(key, 3)
    return dict(
        conv1=init_conv_params(k1, in_channels, hidden_channels, 4),
        conv2=init_conv_params(k2, hidden_channels, hidden_channels, 4),
        conv3=init_conv_params(k3, hidden_channels, embed_dim, 3),
    )


def _conv_layer(x_nhwc, layer, *, stride, pad, relu, normalize, out_dtype):
    B = x_nhwc.shape[0]
    k = layer["k"]
    patches, Ho, Wo = im2col(x_nhwc, k, k, stride=stride, pad=pad,
                             k_padded=layer["k_padded"])
    y = conv_as_matmul(patches, layer["w"], layer["b"], relu=relu,
                       normalize=normalize, out_dtype=out_dtype)
    y = y[:, :layer["c_out"]]                    # drop lane padding
    return y.reshape(B, Ho, Wo, layer["c_out"])


def encoder_forward(x_nchw, params):
    """conv(4,2,1)+ReLU -> conv(4,2,1)+ReLU -> conv(3,1,1) -> L2 norm over the
    channel dim.  Input/output NCHW, matching the PyTorch module."""
    x = jnp.transpose(x_nchw, (0, 2, 3, 1)).astype(jnp.bfloat16)  # NCHW->NHWC
    x = _conv_layer(x, params["conv1"], stride=2, pad=1, relu=True,
                    normalize=False, out_dtype=jnp.bfloat16)
    x = _conv_layer(x, params["conv2"], stride=2, pad=1, relu=True,
                    normalize=False, out_dtype=jnp.bfloat16)
    z = _conv_layer(x, params["conv3"], stride=1, pad=1, relu=False,
                    normalize=True, out_dtype=jnp.float32)
    return jnp.transpose(z, (0, 3, 1, 2))                         # NHWC->NCHW


# --------------------------------- main ------------------------------------ #

if __name__ == "__main__":
    # Small shapes consistent with the module defaults:
    # B=2, C_in=3, 16x16 images, hidden_channels=128, embed_dim=64.
    B, C_IN, H, W = 2, 3, 16, 16
    HIDDEN, EMBED = 128, 64

    key = jax.random.PRNGKey(0)
    kx, kp = jax.random.split(key)
    x = jax.random.normal(kx, (B, C_IN, H, W), dtype=jnp.float32)
    params = make_encoder_params(kp, C_IN, HIDDEN, EMBED)

    z_e = jax.block_until_ready(encoder_forward(x, params))

    # Sanity: shape (B, embed_dim, H/4, W/4), finite values, unit channel norms.
    assert z_e.shape == (B, EMBED, H // 4, W // 4), z_e.shape
    assert bool(jnp.all(jnp.isfinite(z_e)))
    norms = jnp.sqrt(jnp.sum(z_e.astype(jnp.float32) ** 2, axis=1))
    assert bool(jnp.all(jnp.abs(norms - 1.0) < 1e-4))

    print("KERNEL_OK")
</pallas_src>

<mosaic_0001>
module attributes {stable_mosaic.version = 11 : i64} {
  func.func @_matmul_bias_kernel(%arg0: i32, %arg1: memref<128x128xbf16, #tpu.memory_space<vmem>>, %arg2: memref<128x128xbf16, #tpu.memory_space<vmem>>, %arg3: memref<1x128xf32, #tpu.memory_space<vmem>>, %arg4: memref<128x128xbf16, #tpu.memory_space<vmem>>) attributes {dimension_semantics = [#tpu.dimension_semantics<parallel>], iteration_bounds = array<i64: 1>, scalar_prefetch = 0 : i64, scratch_operands = 0 : i64, tpu.core_type = #tpu.core_type<tc>, window_params = [{transform_indices = @transform_0, window_bounds = array<i64: 128, 128>}, {pipeline_mode = #tpu.pipeline_mode<synchronous>, transform_indices = @transform_1, window_bounds = array<i64: 128, 128>}, {pipeline_mode = #tpu.pipeline_mode<synchronous>, transform_indices = @transform_2, window_bounds = array<i64: 1, 128>}, {transform_indices = @transform_3, window_bounds = array<i64: 128, 128>}]} {
    %c0 = arith.constant 0 : index
    %c0_0 = arith.constant 0 : index
    %0 = vector.load %arg1[%c0, %c0_0] : memref<128x128xbf16, #tpu.memory_space<vmem>>, vector<128x128xbf16>
    %c0_1 = arith.constant 0 : index
    %c0_2 = arith.constant 0 : index
    %1 = vector.load %arg2[%c0_1, %c0_2] : memref<128x128xbf16, #tpu.memory_space<vmem>>, vector<128x128xbf16>
    %cst = arith.constant dense<0.000000e+00> : vector<128x128xf32>
    %2 = tpu.matmul %0, %1, %cst {dimension_numbers = #tpu.dot_dimension_numbers<[1], [0], [0], [1], [0, 0, 1, 1], [], []>} : vector<128x128xbf16>, vector<128x128xbf16>, vector<128x128xf32> -> vector<128x128xf32>
    %c0_3 = arith.constant 0 : index
    %c0_4 = arith.constant 0 : index
    %3 = vector.load %arg3[%c0_3, %c0_4] : memref<1x128xf32, #tpu.memory_space<vmem>>, vector<1x128xf32>
    %4 = vector.broadcast %3 : vector<1x128xf32> to vector<128x128xf32>
    %5 = arith.addf %2, %4 : vector<128x128xf32>
    %cst_5 = arith.constant 0.000000e+00 : f32
    %6 = vector.broadcast %cst_5 : f32 to vector<128x128xf32>
    %7 = arith.maximumf %5, %6 : vector<128x128xf32>
    %8 = arith.truncf %7 : vector<128x128xf32> to vector<128x128xbf16>
    %c0_6 = arith.constant 0 : index
    %c0_7 = arith.constant 0 : index
    %9 = vector.load %arg4[%c0_6, %c0_7] : memref<128x128xbf16, #tpu.memory_space<vmem>>, vector<128x128xbf16>
    tpu.vector_store %arg4[%c0_6, %c0_7], %8 {strides = array<i32>} : memref<128x128xbf16, #tpu.memory_space<vmem>>, vector<128x128xbf16>,
    return
  }
  func.func @transform_0(%arg0: i32) -> (i32, i32) {
    %c0_i32 = arith.constant 0 : i32
    %c0_i32_0 = arith.constant 0 : i32
    return %arg0, %c0_i32 : i32, i32
  }
  func.func @transform_1(%arg0: i32) -> (i32, i32) {
    %c0_i32 = arith.constant 0 : i32
    %c0_i32_0 = arith.constant 0 : i32
    %c0_i32_1 = arith.constant 0 : i32
    return %c0_i32, %c0_i32_0 : i32, i32
  }
  func.func @transform_2(%arg0: i32) -> (i32, i32) {
    %c0_i32 = arith.constant 0 : i32
    %c0_i32_0 = arith.constant 0 : i32
    %c0_i32_1 = arith.constant 0 : i32
    return %c0_i32, %c0_i32_0 : i32, i32
  }
  func.func @transform_3(%arg0: i32) -> (i32, i32) {
    %c0_i32 = arith.constant 0 : i32
    %c0_i32_0 = arith.constant 0 : i32
    return %arg0, %c0_i32 : i32, i32
  }
}

</mosaic_0001>

<llo_original>
// kernel: tpu_custom_call.1
$region0: #{tpu_custom_call.1}
  #allocation0 [shape = 'u32[]', space=smem, size = 0x4, offset = 0x4, fixed_abs, tag = 'smem constant byte address 0x4 - core index']
  #allocation1 [shape = 'u32[144,128]{1,0:T(1,128)}', space=vmem, size = 0x12000, scoped, tag = 'internal scratch']
  %s0 = inlined_call_operand.hbm [shape: bf16[128,128], index: 0, kind: input, shape index: {}]
  %s1 = inlined_call_operand.hbm [shape: bf16[128,128], index: 1, kind: input, shape index: {}]
  %s2 = inlined_call_operand.vmem [shape: f32[1,128], index: 2, kind: input, shape index: {}]
  %s3 = inlined_call_operand.hbm [shape: bf16[128,128], index: 3, kind: output, shape index: {}]
  %s4 = sld [smem:[#allocation0]]
  $region30: #{tpu_custom_call.1} parent=0
    _
  %s6 = ssub.s32 1, %s4
  %s7 = scalar_select 0, %s6, %s4
  $region1: #{tpu_custom_call.1} parent=0
    #allocation2 [shape = 'u8[32768]{0}', space=vmem, size = 0x8000, scoped, tag = 'input window, operand 0, single buffered']
    #allocation3 [shape = 's32[1]{0}', space=sflag, size = 0x4, scoped, tag = 'scoped memory for tpu_custom_call.1']
    #allocation4 [shape = 's32[1]{0}', space=sflag, size = 0x4, scoped, tag = 'scoped memory for tpu_custom_call.1']
    #allocation5 [shape = 'u8[32768]{0}', space=vmem, size = 0x8000, scoped, tag = 'input window, operand 1, single buffered']
    #allocation6 [shape = 's32[1]{0}', space=sflag, size = 0x4, scoped, tag = 'scoped memory for tpu_custom_call.1']
    #allocation7 [shape = 'u8[32768]{0}', space=vmem, size = 0x8000, scoped, tag = 'output window, operand 0, single buffered']
    %8 = vsyncpa [#allocation3], 0
    %9 = vsyncpa [#allocation6], 0
    %10 = vsyncpa [#allocation4], 0
    // Predicated region
    $region2: #{tpu_custom_call.1} parent=1 // pred_check
      _
    $region3: #{tpu_custom_call.1} parent=1 // pred_check_branch
      %12 = sbr.rel (0) target = $region5
    $region4: #{tpu_custom_call.1} parent=1 // pred_region
      %s14 = ssub.s32 1024, 1024
      %15 = vsyncadd [#allocation3], %s14
      %s16 = sshll.u32 [#allocation2], 4
      %s17 = int_to_ptr.vmem [resolvable:$true] %s16
      %22 = dma.hbm_to_vmem [thread:$0]  %s0, 1024, %s17, [#allocation3], 64, 64, 4
    $region5: #{tpu_custom_call.1} parent=1 // pred_fallthru
      _
    // Predicated region
    $region6: #{tpu_custom_call.1} parent=1 // pred_check
      _
    $region7: #{tpu_custom_call.1} parent=1 // pred_check_branch
      %24 = sbr.rel (0) target = $region9
    $region8: #{tpu_custom_call.1} parent=1 // pred_region
      %s26 = ssub.s32 1024, 1024
      %27 = vsyncadd [#allocation6], %s26
      %s28 = sshll.u32 [#allocation5], 4
      %s29 = int_to_ptr.vmem [resolvable:$true] %s28
      %34 = dma.hbm_to_vmem [thread:$0]  %s1, 1024, %s29, [#allocation6], 64, 64, 4
    $region9: #{tpu_custom_call.1} parent=1 // pred_fallthru
      _
    // Predicated region
    $region10: #{tpu_custom_call.1} parent=1 // pred_check
      _
    $region11: #{tpu_custom_call.1} parent=1 // pred_check_branch
      %36 = sbr.rel (0) target = $region13
    $region12: #{tpu_custom_call.1} parent=1 // pred_region
      _
    $region13: #{tpu_custom_call.1} parent=1 // pred_fallthru
      _
    // Predicated region
    $region14: #{tpu_custom_call.1} parent=1 // pred_check
      _
    $region15: #{tpu_custom_call.1} parent=1 // pred_check_branch
      %38 = sbr.rel (0) target = $region17
    $region16: #{tpu_custom_call.1} parent=1 // pred_region
      %39 = dma.done [#allocation3], 1024
    $region17: #{tpu_custom_call.1} parent=1 // pred_fallthru
      _
    // Predicated region
    $region18: #{tpu_custom_call.1} parent=1 // pred_check
      _
    $region19: #{tpu_custom_call.1} parent=1 // pred_check_branch
      %41 = sbr.rel (0) target = $region21
    $region20: #{tpu_custom_call.1} parent=1 // pred_region
      %42 = dma.done [#allocation6], 1024
    $region21: #{tpu_custom_call.1} parent=1 // pred_fallthru
      _
    %v44 = vld [vmem:[#allocation2] sm:$0xf]
    %v45 = vld [vmem:[#allocation2 + $0x4] sm:$0xf]
    %v46 = vld [vmem:[#allocation2 + $0x8] sm:$0xf]
    %v47 = vld [vmem:[#allocation2 + $0xc] sm:$0xf]
    %v48 = vld [vmem:[#allocation2 + $0x10] sm:$0xf]
    %v49 = vld [vmem:[#allocation2 + $0x14] sm:$0xf]
    %v50 = vld [vmem:[#allocation2 + $0x18] sm:$0xf]
    %v51 = vld [vmem:[#allocation2 + $0x1c] sm:$0xf]
    %v52 = vld [vmem:[#allocation2 + $0x20] sm:$0xf]
    %v53 = vld [vmem:[#allocation2 + $0x24] sm:$0xf]
    %v54 = vld [vmem:[#allocation2 + $0x28] sm:$0xf]
    %v55 = vld [vmem:[#allocation2 + $0x2c] sm:$0xf]
    %v56 = vld [vmem:[#allocation2 + $0x30] sm:$0xf]
    %v57 = vld [vmem:[#allocation2 + $0x34] sm:$0xf]
    %v58 = vld [vmem:[#allocation2 + $0x38] sm:$0xf]
    %v59 = vld [vmem:[#allocation2 + $0x3c] sm:$0xf]
    %v60 = vld [vmem:[#allocation5] sm:$0xf]
    %v61 = vld [vmem:[#allocation5 + $0x4] sm:$0xf]
    %v62 = vld [vmem:[#allocation5 + $0x8] sm:$0xf]
    %v63 = vld [vmem:[#allocation5 + $0xc] sm:$0xf]
    %v64 = vld [vmem:[#allocation5 + $0x10] sm:$0xf]
    %v65 = vld [vmem:[#allocation5 + $0x14] sm:$0xf]
    %v66 = vld [vmem:[#allocation5 + $0x18] sm:$0xf]
    %v67 = vld [vmem:[#allocation5 + $0x1c] sm:$0xf]
    %v68 = vld [vmem:[#allocation5 + $0x20] sm:$0xf]
    %v69 = vld [vmem:[#allocation5 + $0x24] sm:$0xf]
    %v70 = vld [vmem:[#allocation5 + $0x28] sm:$0xf]
    %v71 = vld [vmem:[#allocation5 + $0x2c] sm:$0xf]
    %v72 = vld [vmem:[#allocation5 + $0x30] sm:$0xf]
    %v73 = vld [vmem:[#allocation5 + $0x34] sm:$0xf]
    %v74 = vld [vmem:[#allocation5 + $0x38] sm:$0xf]
    %v75 = vld [vmem:[#allocation5 + $0x3c] sm:$0xf]
    %v76 = vld [vmem:[%s2] sm:$0x1]
    %v78 = vlaneseq
    %v79 = vshrl.u32 %v78, 7
    %v80 = vsub.s32 0, %v79
    %v81 = vrot.slane %v76, %v80
    %v99 = vunpack.c.l.b16 %v44
    %v100 = vunpack.c.l.b16 %v45
    %v101 = vunpack.c.l.b16 %v46
    %v102 = vunpack.c.l.b16 %v47
    %v103 = vunpack.c.l.b16 %v48
    %v104 = vunpack.c.l.b16 %v49
    %v105 = vunpack.c.l.b16 %v50
    %v106 = vunpack.c.l.b16 %v51
    %v107 = vunpack.c.l.b16 %v52
    %v108 = vunpack.c.l.b16 %v53
    %v109 = vunpack.c.l.b16 %v54
    %v110 = vunpack.c.l.b16 %v55
    %v111 = vunpack.c.l.b16 %v56
    %v112 = vunpack.c.l.b16 %v57
    %v113 = vunpack.c.l.b16 %v58
    %v114 = vunpack.c.l.b16 %v59
    %v115 = vpack.c.b16 %v100, %v99
    %v116 = vpack.c.b16 %v102, %v101
    %v117 = vpack.c.b16 %v104, %v103
    %v118 = vpack.c.b16 %v106, %v105
    %v119 = vpack.c.b16 %v108, %v107
    %v120 = vpack.c.b16 %v110, %v109
    %v121 = vpack.c.b16 %v112, %v111
    %v122 = vpack.c.b16 %v114, %v113
    %v147 = vunpack.c.l.b16 %v60
    %v148 = vunpack.c.l.b16 %v61
    %v149 = vunpack.c.l.b16 %v62
    %v150 = vunpack.c.l.b16 %v63
    %v151 = vunpack.c.l.b16 %v64
    %v152 = vunpack.c.l.b16 %v65
    %v153 = vunpack.c.l.b16 %v66
    %v154 = vunpack.c.l.b16 %v67
    %v155 = vunpack.c.l.b16 %v68
    %v156 = vunpack.c.l.b16 %v69
    %v157 = vunpack.c.l.b16 %v70
    %v158 = vunpack.c.l.b16 %v71
    %v159 = vunpack.c.l.b16 %v72
    %v160 = vunpack.c.l.b16 %v73
    %v161 = vunpack.c.l.b16 %v74
    %v162 = vunpack.c.l.b16 %v75
    %v163 = vpack.c.b16 %v148, %v147
    %v164 = vpack.c.b16 %v150, %v149
    %v165 = vpack.c.b16 %v152, %v151
    %v166 = vpack.c.b16 %v154, %v153
    %v167 = vpack.c.b16 %v156, %v155
    %v168 = vpack.c.b16 %v158, %v157
    %v169 = vpack.c.b16 %v160, %v159
    %v170 = vpack.c.b16 %v162, %v161
    %179 = vmatprep.subr.bf16.mxu0 0
    %180 = vmatpush1.bf16.msra.mxu0 %v170
    %181 = vmatprep.subr.bf16.mxu0 0
    %182 = vmatpush1.bf16.msra.mxu0 %v169
    %183 = vmatprep.subr.bf16.mxu0 0
    %184 = vmatpush1.bf16.msra.mxu0 %v168
    %185 = vmatprep.subr.bf16.mxu0 0
    %186 = vmatpush1.bf16.msra.mxu0 %v167
    %187 = vmatprep.subr.bf16.mxu0 0
    %188 = vmatpush1.bf16.msra.mxu0 %v166
    %189 = vmatprep.subr.bf16.mxu0 0
    %190 = vmatpush1.bf16.msra.mxu0 %v165
    %191 = vmatprep.subr.bf16.mxu0 0
    %192 = vmatpush1.bf16.msra.mxu0 %v164
    %193 = vmatprep.subr.bf16.mxu0 0
    %194 = vmatpush1.bf16.msra.mxu0 %v163
    %195 = vmatprep.subr.bf16.mxu0 0
    %196 = vmatpush2.bf16.msra.mxu0 0
    %197 = vmatprep.subr.bf16.mxu0 0
    %198 = vmatpush2.bf16.msra.mxu0 0
    %199 = vmatprep.subr.bf16.mxu0 0
    %200 = vmatpush2.bf16.msra.mxu0 0
    %201 = vmatprep.subr.bf16.mxu0 0
    %202 = vmatpush2.bf16.msra.mxu0 0
    %203 = vmatprep.subr.bf16.mxu0 0
    %204 = vmatpush2.bf16.msra.mxu0 0
    %205 = vmatprep.subr.bf16.mxu0 0
    %206 = vmatpush2.bf16.msra.mxu0 0
    %207 = vmatprep.subr.bf16.mxu0 0
    %208 = vmatpush2.bf16.msra.mxu0 0
    %209 = vmatprep.subr.bf16.mxu0 0
    %210 = vmatpush2.bf16.msra.mxu0 0
    %211 = vmatprep.mubr.bf16.mxu0 0
    %212 = vmatmul.mubr.bf16.gmra.mxu0 %v115
    %v213 = vpop.f32.mrf.mxu0
    %v214 = vadd.f32 %v81, %v213
    %v215 = vpop.f32.mrf.mxu0
    %v216 = vpop.f32.mrf.mxu0
    %v217 = vadd.f32 %v81, %v216
    %v218 = vpop.f32.mrf.mxu0
    %219 = vmatprep.mubr.bf16.mxu0 0
    %220 = vmatmul.mubr.bf16.gmra.mxu0 %v116
    %v221 = vpop.f32.mrf.mxu0
    %v222 = vadd.f32 %v81, %v221
    %v223 = vpop.f32.mrf.mxu0
    %v224 = vpop.f32.mrf.mxu0
    %v225 = vadd.f32 %v81, %v224
    %v226 = vpop.f32.mrf.mxu0
    %227 = vmatprep.mubr.bf16.mxu0 0
    %228 = vmatmul.mubr.bf16.gmra.mxu0 %v117
    %v229 = vpop.f32.mrf.mxu0
    %v230 = vadd.f32 %v81, %v229
    %v231 = vpop.f32.mrf.mxu0
    %v232 = vpop.f32.mrf.mxu0
    %v233 = vadd.f32 %v81, %v232
    %v234 = vpop.f32.mrf.mxu0
    %235 = vmatprep.mubr.bf16.mxu0 0
    %236 = vmatmul.mubr.bf16.gmra.mxu0 %v118
    %v237 = vpop.f32.mrf.mxu0
    %v238 = vadd.f32 %v81, %v237
    %v239 = vpop.f32.mrf.mxu0
    %v240 = vpop.f32.mrf.mxu0
    %v241 = vadd.f32 %v81, %v240
    %v242 = vpop.f32.mrf.mxu0
    %243 = vmatprep.mubr.bf16.mxu0 0
    %244 = vmatmul.mubr.bf16.gmra.mxu0 %v119
    %v245 = vpop.f32.mrf.mxu0
    %v246 = vadd.f32 %v81, %v245
    %v247 = vpop.f32.mrf.mxu0
    %v248 = vpop.f32.mrf.mxu0
    %v249 = vadd.f32 %v81, %v248
    %v250 = vpop.f32.mrf.mxu0
    %251 = vmatprep.mubr.bf16.mxu0 0
    %252 = vmatmul.mubr.bf16.gmra.mxu0 %v120
    %v253 = vpop.f32.mrf.mxu0
    %v254 = vadd.f32 %v81, %v253
    %v255 = vpop.f32.mrf.mxu0
    %v256 = vpop.f32.mrf.mxu0
    %v257 = vadd.f32 %v81, %v256
    %v258 = vpop.f32.mrf.mxu0
    %259 = vmatprep.mubr.bf16.mxu0 0
    %260 = vmatmul.mubr.bf16.gmra.mxu0 %v121
    %v261 = vpop.f32.mrf.mxu0
    %v262 = vadd.f32 %v81, %v261
    %v263 = vpop.f32.mrf.mxu0
    %v264 = vpop.f32.mrf.mxu0
    %v265 = vadd.f32 %v81, %v264
    %v266 = vpop.f32.mrf.mxu0
    %267 = vmatprep.mubr.bf16.mxu0 0
    %268 = vmatmul.mubr.bf16.gmra.mxu0 %v122
    %v269 = vpop.f32.mrf.mxu0
    %v270 = vadd.f32 %v81, %v269
    %v271 = vpop.f32.mrf.mxu0
    %v272 = vpop.f32.mrf.mxu0
    %v273 = vadd.f32 %v81, %v272
    %v274 = vpop.f32.mrf.mxu0
    %275 = vdwg.mxu0
    %v276 = vmax.f32 %v214, 0.0
    %v277 = vmax.f32 %v217, 0.0
    %v278 = vmax.f32 %v222, 0.0
    %v279 = vmax.f32 %v225, 0.0
    %v280 = vmax.f32 %v230, 0.0
    %v281 = vmax.f32 %v233, 0.0
    %v282 = vmax.f32 %v238, 0.0
    %v283 = vmax.f32 %v241, 0.0
    %v284 = vmax.f32 %v246, 0.0
    %v285 = vmax.f32 %v249, 0.0
    %v286 = vmax.f32 %v254, 0.0
    %v287 = vmax.f32 %v257, 0.0
    %v288 = vmax.f32 %v262, 0.0
    %v289 = vmax.f32 %v265, 0.0
    %v290 = vmax.f32 %v270, 0.0
    %v291 = vmax.f32 %v273, 0.0
    %v292 = vpack.c.bf16 %v277, %v276
    %v293 = vpack.c.bf16 %v279, %v278
    %v294 = vpack.c.bf16 %v281, %v280
    %v295 = vpack.c.bf16 %v283, %v282
    %v296 = vpack.c.bf16 %v285, %v284
    %v297 = vpack.c.bf16 %v287, %v286
    %v298 = vpack.c.bf16 %v289, %v288
    %v299 = vpack.c.bf16 %v291, %v290
    %v308 = vunpack.c.l.b16 %v292
    %v309 = vunpack.c.h.b16 %v292
    %v310 = vunpack.c.l.b16 %v293
    %v311 = vunpack.c.h.b16 %v293
    %v312 = vunpack.c.l.b16 %v294
    %v313 = vunpack.c.h.b16 %v294
    %v314 = vunpack.c.l.b16 %v295
    %v315 = vunpack.c.h.b16 %v295
    %v316 = vunpack.c.l.b16 %v296
    %v317 = vunpack.c.h.b16 %v296
    %v318 = vunpack.c.l.b16 %v297
    %v319 = vunpack.c.h.b16 %v297
    %v320 = vunpack.c.l.b16 %v298
    %v321 = vunpack.c.h.b16 %v298
    %v322 = vunpack.c.l.b16 %v299
    %v323 = vunpack.c.h.b16 %v299
    %v324 = vpack.c.b16 %v308, %v308
    %v325 = vpack.c.b16 %v309, %v309
    %v326 = vpack.c.b16 %v310, %v310
    %v327 = vpack.c.b16 %v311, %v311
    %v328 = vpack.c.b16 %v312, %v312
    %v329 = vpack.c.b16 %v313, %v313
    %v330 = vpack.c.b16 %v314, %v314
    %v331 = vpack.c.b16 %v315, %v315
    %v332 = vpack.c.b16 %v316, %v316
    %v333 = vpack.c.b16 %v317, %v317
    %v334 = vpack.c.b16 %v318, %v318
    %v335 = vpack.c.b16 %v319, %v319
    %v336 = vpack.c.b16 %v320, %v320
    %v337 = vpack.c.b16 %v321, %v321
    %v338 = vpack.c.b16 %v322, %v322
    %v339 = vpack.c.b16 %v323, %v323
    %356 = vst [vmem:[#allocation7] sm:$0xf] %v324
    %357 = vst [vmem:[#allocation7 + $0x4] sm:$0xf] %v325
    %358 = vst [vmem:[#allocation7 + $0x8] sm:$0xf] %v326
    %359 = vst [vmem:[#allocation7 + $0xc] sm:$0xf] %v327
    %360 = vst [vmem:[#allocation7 + $0x10] sm:$0xf] %v328
    %361 = vst [vmem:[#allocation7 + $0x14] sm:$0xf] %v329
    %362 = vst [vmem:[#allocation7 + $0x18] sm:$0xf] %v330
    %363 = vst [vmem:[#allocation7 + $0x1c] sm:$0xf] %v331
    %364 = vst [vmem:[#allocation7 + $0x20] sm:$0xf] %v332
    %365 = vst [vmem:[#allocation7 + $0x24] sm:$0xf] %v333
    %366 = vst [vmem:[#allocation7 + $0x28] sm:$0xf] %v334
    %367 = vst [vmem:[#allocation7 + $0x2c] sm:$0xf] %v335
    %368 = vst [vmem:[#allocation7 + $0x30] sm:$0xf] %v336
    %369 = vst [vmem:[#allocation7 + $0x34] sm:$0xf] %v337
    %370 = vst [vmem:[#allocation7 + $0x38] sm:$0xf] %v338
    %371 = vst [vmem:[#allocation7 + $0x3c] sm:$0xf] %v339
    // Predicated region
    $region22: #{tpu_custom_call.1} parent=1 // pred_check
      _
    $region23: #{tpu_custom_call.1} parent=1 // pred_check_branch
      %373 = sbr.rel (0) target = $region25
    $region24: #{tpu_custom_call.1} parent=1 // pred_region
      %s375 = ssub.s32 1024, 1024
      %376 = vsyncadd [#allocation4], %s375
      %s377 = sshll.u32 [#allocation7], 4
      %s378 = int_to_ptr.vmem [resolvable:$true] %s377
      %383 = dma.vmem_to_hbm [thread:$0]  %s378, 1024, %s3, [#allocation4], 64, 64, 4
    $region25: #{tpu_custom_call.1} parent=1 // pred_fallthru
      _
    // Predicated region
    $region26: #{tpu_custom_call.1} parent=1 // pred_check
      _
    $region27: #{tpu_custom_call.1} parent=1 // pred_check_branch
      %385 = sbr.rel (0) target = $region29
    $region28: #{tpu_custom_call.1} parent=1 // pred_region
      %386 = dma.done [#allocation4], 1024
    $region29: #{tpu_custom_call.1} parent=1 // pred_fallthru
      _
    %387 = vsyncpa [#allocation3], 1
    %388 = vsyncpa [#allocation6], 1
    %389 = vsyncpa [#allocation4], 1

</llo_original>
